<compile_context>
chip_gen: v7x
topology: tpu7x:2x2x1
jax: 0.10.0
libtpu: 0.0.40
codegen_flags: <defaults>
</compile_context>

<pallas_src>
import functools

import jax
import jax.numpy as jnp
from jax.experimental import pallas as pl
from jax.experimental.pallas import tpu as pltpu

LANE = 128


def _pad_axis(x, axis, multiple):
    pad = (-x.shape[axis]) % multiple
    if pad == 0:
        return x
    widths = [(0, 0)] * x.ndim
    widths[axis] = (0, pad)
    return jnp.pad(x, widths)


# ------------------------------ Pallas kernel ------------------------------ #

def _linear_kernel(a_ref, b_ref, bias_ref, o_ref, acc_ref, *, activation, n_valid):
    k = pl.program_id(2)

    @pl.when(k == 0)
    def _init():
        acc_ref[...] = jnp.zeros_like(acc_ref)

    acc_ref[...] += jnp.dot(a_ref[...], b_ref[...],
                            preferred_element_type=jnp.float32)

    @pl.when(k == pl.num_programs(2) - 1)
    def _finalize():
        out = acc_ref[...] + bias_ref[...]
        if activation == "relu":
            out = jnp.maximum(out, 0.0)
        elif activation == "logsoftmax":
            # Masked log-softmax over the valid (un-padded) lanes only.
            lane = jax.lax.broadcasted_iota(jnp.int32, out.shape, 1)
            valid = lane < n_valid
            m = jnp.max(jnp.where(valid, out, -jnp.inf), axis=-1, keepdims=True)
            z = out - m
            denom = jnp.sum(jnp.where(valid, jnp.exp(z), 0.0),
                            axis=-1, keepdims=True)
            out = z - jnp.log(denom)
        o_ref[...] = out.astype(o_ref.dtype)


def linear_pallas(x, w, b, *, activation=None, out_dtype=jnp.float32):
    """activation(x @ w + b).  x:(M,K)  w:(K,N)  b:(N,)  ->  (M, N) out_dtype."""
    M, K = x.shape
    Kw, N = w.shape
    assert K == Kw

    # bf16 MXU inputs (f32 accumulation in-kernel); pad K / N to lane multiples.
    a = _pad_axis(x.astype(jnp.bfloat16), 1, LANE)
    wp = _pad_axis(_pad_axis(w.astype(jnp.bfloat16), 0, LANE), 1, LANE)
    bp = _pad_axis(b.astype(jnp.float32), 0, LANE).reshape(1, -1)
    Kp, Np = wp.shape

    # Tile sizes: multiples of (8, 128) or the full dim; K (reduction) axis last.
    tm = 256 if M % 256 == 0 else M
    tn = Np if activation == "logsoftmax" else (256 if Np % 256 == 0 else 128)
    tk = 512 if Kp % 512 == 0 else (256 if Kp % 256 == 0 else 128)
    if activation == "logsoftmax":
        assert tn == Np, "logsoftmax epilogue needs the full N in one tile"
    grid = (M // tm, Np // tn, Kp // tk)

    kernel = functools.partial(_linear_kernel, activation=activation, n_valid=N)

    out = pl.pallas_call(
        kernel,
        out_shape=jax.ShapeDtypeStruct((M, Np), out_dtype),
        grid_spec=pltpu.PrefetchScalarGridSpec(
            num_scalar_prefetch=0,
            grid=grid,
            in_specs=[
                pl.BlockSpec((tm, tk), lambda i, j, k: (i, k)),
                pl.BlockSpec((tk, tn), lambda i, j, k: (k, j)),
                pl.BlockSpec((1, tn), lambda i, j, k: (0, j)),
            ],
            out_specs=pl.BlockSpec((tm, tn), lambda i, j, k: (i, j)),
            scratch_shapes=[pltpu.VMEM((tm, tn), jnp.float32)],
        ),
        compiler_params=pltpu.CompilerParams(
            dimension_semantics=("parallel", "parallel", "arbitrary")),
    )(a, wp, bp)
    return out[:, :N]


# ------------------------------- model glue -------------------------------- #

def dropout(x, p, key):
    # TODO(synk): PyTorch's RNG stream cannot be reproduced; training-mode
    # semantics (mask + 1/(1-p) scaling) are matched with a deterministic JAX PRNG.
    keep = jax.random.bernoulli(key, 1.0 - p, x.shape)
    return jnp.where(keep, x / (1.0 - p), 0.0).astype(x.dtype)


def init_params(dim_in, dim_hidden, dim_out, seed=1234):
    key = jax.random.PRNGKey(seed)
    k1, k2, k3, k4 = jax.random.split(key, 4)
    lim1 = 1.0 / float(jnp.sqrt(dim_in))
    lim2 = 1.0 / float(jnp.sqrt(dim_hidden))
    return {
        "w1": jax.random.uniform(k1, (dim_in, dim_hidden), jnp.float32, -lim1, lim1),
        "b1": jax.random.uniform(k2, (dim_hidden,), jnp.float32, -lim1, lim1),
        "w2": jax.random.uniform(k3, (dim_hidden, dim_out), jnp.float32, -lim2, lim2),
        "b2": jax.random.uniform(k4, (dim_out,), jnp.float32, -lim2, lim2),
    }


def mlp_forward(params, x, key, dropout_p=0.5):
    n = x.shape[0]
    xf = x.reshape(n, -1)                       # x.view(-1, C*H*W)
    # layer_input (+ fused ReLU).  ReLU commutes exactly with dropout's
    # non-negative mask/scale, so relu(dropout(z)) == dropout(relu(z)).
    h = linear_pallas(xf, params["w1"], params["b1"],
                      activation="relu", out_dtype=jnp.bfloat16)
    h = dropout(h, dropout_p, key)
    # layer_hidden (+ fused LogSoftmax over the valid output lanes).
    return linear_pallas(h, params["w2"], params["b2"],
                         activation="logsoftmax", out_dtype=jnp.float32)


# ---------------------------------- main ----------------------------------- #

if __name__ == "__main__":
    batch, channels, spatial = 2, 4, 16
    dim_in = channels * spatial * spatial       # 1024
    dim_hidden, dim_out = 64, 10

    params = init_params(dim_in, dim_hidden, dim_out)

    key = jax.random.PRNGKey(0)
    kx, kd = jax.random.split(key)
    x = jax.random.normal(kx, (batch, channels, spatial, spatial), jnp.float32)

    fwd = jax.jit(mlp_forward)
    out = jax.block_until_ready(fwd(params, x, kd))

    assert out.shape == (batch, dim_out), out.shape
    assert bool(jnp.all(jnp.isfinite(out)))

    # Pure-JAX reference, spec order (linear -> dropout -> relu -> linear ->
    # log_softmax), mirroring the kernel's bf16 input quantization & same mask.
    xf = x.reshape(batch, -1)
    w1q = params["w1"].astype(jnp.bfloat16).astype(jnp.float32)
    w2q = params["w2"].astype(jnp.bfloat16).astype(jnp.float32)
    z1 = xf.astype(jnp.bfloat16).astype(jnp.float32) @ w1q + params["b1"]
    keep = jax.random.bernoulli(kd, 0.5, z1.shape)
    z1 = jnp.where(keep, z1 / 0.5, 0.0)
    h_ref = jnp.maximum(z1, 0.0).astype(jnp.bfloat16).astype(jnp.float32)
    z2 = h_ref @ w2q + params["b2"]
    ref = jax.nn.log_softmax(z2, axis=1)
    assert bool(jnp.allclose(out, ref, atol=2e-2, rtol=2e-2))

    print("KERNEL_OK")
</pallas_src>

<mosaic_0001>
module attributes {stable_mosaic.version = 11 : i64} {
  func.func @_linear_kernel(%arg0: i32, %arg1: i32, %arg2: i32, %arg3: memref<2x512xbf16, #tpu.memory_space<vmem>>, %arg4: memref<512x128xbf16, #tpu.memory_space<vmem>>, %arg5: memref<1x128xf32, #tpu.memory_space<vmem>>, %arg6: memref<2x128xbf16, #tpu.memory_space<vmem>>, %arg7: memref<2x128xf32, #tpu.memory_space<vmem>>) attributes {dimension_semantics = [#tpu.dimension_semantics<parallel>, #tpu.dimension_semantics<parallel>, #tpu.dimension_semantics<arbitrary>], iteration_bounds = array<i64: 1, 1, 2>, scalar_prefetch = 0 : i64, scratch_operands = 1 : i64, tpu.core_type = #tpu.core_type<tc>, window_params = [{transform_indices = @transform_0, window_bounds = array<i64: 2, 512>}, {transform_indices = @transform_1, window_bounds = array<i64: 512, 128>}, {transform_indices = @transform_2, window_bounds = array<i64: 1, 128>}, {transform_indices = @transform_3, window_bounds = array<i64: 2, 128>}]} {
    %c0_i32 = arith.constant 0 : i32
    %0 = arith.cmpi eq, %arg2, %c0_i32 : i32
    %1 = arith.extui %0 : i1 to i32
    %c0_i32_0 = arith.constant 0 : i32
    %2 = arith.cmpi ne, %1, %c0_i32_0 : i32
    scf.if %2 {
      %cst_9 = arith.constant 0.000000e+00 : f32
      %12 = vector.broadcast %cst_9 : f32 to vector<2x128xf32>
      %c0_10 = arith.constant 0 : index
      %c0_11 = arith.constant 0 : index
      %13 = vector.load %arg7[%c0_10, %c0_11] : memref<2x128xf32, #tpu.memory_space<vmem>>, vector<2x128xf32>
      tpu.vector_store %arg7[%c0_10, %c0_11], %12 {strides = array<i32>} : memref<2x128xf32, #tpu.memory_space<vmem>>, vector<2x128xf32>,
    } else {
    }
    %c0 = arith.constant 0 : index
    %c0_1 = arith.constant 0 : index
    %3 = vector.load %arg7[%c0, %c0_1] : memref<2x128xf32, #tpu.memory_space<vmem>>, vector<2x128xf32>
    %c0_2 = arith.constant 0 : index
    %c0_3 = arith.constant 0 : index
    %4 = vector.load %arg3[%c0_2, %c0_3] : memref<2x512xbf16, #tpu.memory_space<vmem>>, vector<2x512xbf16>
    %c0_4 = arith.constant 0 : index
    %c0_5 = arith.constant 0 : index
    %5 = vector.load %arg4[%c0_4, %c0_5] : memref<512x128xbf16, #tpu.memory_space<vmem>>, vector<512x128xbf16>
    %cst = arith.constant dense<0.000000e+00> : vector<2x128xf32>
    %6 = tpu.matmul %4, %5, %cst {dimension_numbers = #tpu.dot_dimension_numbers<[1], [0], [0], [1], [0, 0, 1, 1], [], []>} : vector<2x512xbf16>, vector<512x128xbf16>, vector<2x128xf32> -> vector<2x128xf32>
    %7 = arith.addf %3, %6 : vector<2x128xf32>
    %c0_6 = arith.constant 0 : index
    %c0_7 = arith.constant 0 : index
    %8 = vector.load %arg7[%c0_6, %c0_7] : memref<2x128xf32, #tpu.memory_space<vmem>>, vector<2x128xf32>
    tpu.vector_store %arg7[%c0_6, %c0_7], %7 {strides = array<i32>} : memref<2x128xf32, #tpu.memory_space<vmem>>, vector<2x128xf32>,
    %c1_i32 = arith.constant 1 : i32
    %9 = arith.cmpi eq, %arg2, %c1_i32 : i32
    %10 = arith.extui %9 : i1 to i32
    %c0_i32_8 = arith.constant 0 : i32
    %11 = arith.cmpi ne, %10, %c0_i32_8 : i32
    scf.if %11 {
      %c0_9 = arith.constant 0 : index
      %c0_10 = arith.constant 0 : index
      %12 = vector.load %arg7[%c0_9, %c0_10] : memref<2x128xf32, #tpu.memory_space<vmem>>, vector<2x128xf32>
      %c0_11 = arith.constant 0 : index
      %c0_12 = arith.constant 0 : index
      %13 = vector.load %arg5[%c0_11, %c0_12] : memref<1x128xf32, #tpu.memory_space<vmem>>, vector<1x128xf32>
      %14 = vector.broadcast %13 : vector<1x128xf32> to vector<2x128xf32>
      %15 = arith.addf %12, %14 : vector<2x128xf32>
      %cst_13 = arith.constant 0.000000e+00 : f32
      %16 = vector.broadcast %cst_13 : f32 to vector<2x128xf32>
      %17 = arith.maximumf %15, %16 : vector<2x128xf32>
      %18 = arith.truncf %17 : vector<2x128xf32> to vector<2x128xbf16>
      %c0_14 = arith.constant 0 : index
      %c0_15 = arith.constant 0 : index
      %19 = vector.load %arg6[%c0_14, %c0_15] : memref<2x128xbf16, #tpu.memory_space<vmem>>, vector<2x128xbf16>
      tpu.vector_store %arg6[%c0_14, %c0_15], %18 {strides = array<i32>} : memref<2x128xbf16, #tpu.memory_space<vmem>>, vector<2x128xbf16>,
    } else {
    }
    return
  }
  func.func @transform_0(%arg0: i32, %arg1: i32, %arg2: i32) -> (i32, i32) {
    %c0_i32 = arith.constant 0 : i32
    return %arg0, %arg2 : i32, i32
  }
  func.func @transform_1(%arg0: i32, %arg1: i32, %arg2: i32) -> (i32, i32) {
    %c0_i32 = arith.constant 0 : i32
    return %arg2, %arg1 : i32, i32
  }
  func.func @transform_2(%arg0: i32, %arg1: i32, %arg2: i32) -> (i32, i32) {
    %c0_i32 = arith.constant 0 : i32
    %c0_i32_0 = arith.constant 0 : i32
    return %c0_i32, %arg1 : i32, i32
  }
  func.func @transform_3(%arg0: i32, %arg1: i32, %arg2: i32) -> (i32, i32) {
    %c0_i32 = arith.constant 0 : i32
    return %arg0, %arg1 : i32, i32
  }
}

module attributes {stable_mosaic.version = 11 : i64} {
  func.func @_linear_kernel(%arg0: i32, %arg1: i32, %arg2: i32, %arg3: memref<2x128xbf16, #tpu.memory_space<vmem>>, %arg4: memref<128x128xbf16, #tpu.memory_space<vmem>>, %arg5: memref<1x128xf32, #tpu.memory_space<vmem>>, %arg6: memref<2x128xf32, #tpu.memory_space<vmem>>, %arg7: memref<2x128xf32, #tpu.memory_space<vmem>>) attributes {dimension_semantics = [#tpu.dimension_semantics<parallel>, #tpu.dimension_semantics<parallel>, #tpu.dimension_semantics<arbitrary>], iteration_bounds = array<i64: 1, 1, 1>, scalar_prefetch = 0 : i64, scratch_operands = 1 : i64, tpu.core_type = #tpu.core_type<tc>, window_params = [{transform_indices = @transform_0, window_bounds = array<i64: 2, 128>}, {transform_indices = @transform_1, window_bounds = array<i64: 128, 128>}, {transform_indices = @transform_2, window_bounds = array<i64: 1, 128>}, {transform_indices = @transform_3, window_bounds = array<i64: 2, 128>}]} {
    %c0_i32 = arith.constant 0 : i32
    %0 = arith.cmpi eq, %arg2, %c0_i32 : i32
    %1 = arith.extui %0 : i1 to i32
    %c0_i32_0 = arith.constant 0 : i32
    %2 = arith.cmpi ne, %1, %c0_i32_0 : i32
    scf.if %2 {
      %cst_10 = arith.constant 0.000000e+00 : f32
      %12 = vector.broadcast %cst_10 : f32 to vector<2x128xf32>
      %c0_11 = arith.constant 0 : index
      %c0_12 = arith.constant 0 : index
      %13 = vector.load %arg7[%c0_11, %c0_12] : memref<2x128xf32, #tpu.memory_space<vmem>>, vector<2x128xf32>
      tpu.vector_store %arg7[%c0_11, %c0_12], %12 {strides = array<i32>} : memref<2x128xf32, #tpu.memory_space<vmem>>, vector<2x128xf32>,
    } else {
    }
    %c0 = arith.constant 0 : index
    %c0_1 = arith.constant 0 : index
    %3 = vector.load %arg7[%c0, %c0_1] : memref<2x128xf32, #tpu.memory_space<vmem>>, vector<2x128xf32>
    %c0_2 = arith.constant 0 : index
    %c0_3 = arith.constant 0 : index
    %4 = vector.load %arg3[%c0_2, %c0_3] : memref<2x128xbf16, #tpu.memory_space<vmem>>, vector<2x128xbf16>
    %c0_4 = arith.constant 0 : index
    %c0_5 = arith.constant 0 : index
    %5 = vector.load %arg4[%c0_4, %c0_5] : memref<128x128xbf16, #tpu.memory_space<vmem>>, vector<128x128xbf16>
    %cst = arith.constant dense<0.000000e+00> : vector<2x128xf32>
    %6 = tpu.matmul %4, %5, %cst {dimension_numbers = #tpu.dot_dimension_numbers<[1], [0], [0], [1], [0, 0, 1, 1], [], []>} : vector<2x128xbf16>, vector<128x128xbf16>, vector<2x128xf32> -> vector<2x128xf32>
    %7 = arith.addf %3, %6 : vector<2x128xf32>
    %c0_6 = arith.constant 0 : index
    %c0_7 = arith.constant 0 : index
    %8 = vector.load %arg7[%c0_6, %c0_7] : memref<2x128xf32, #tpu.memory_space<vmem>>, vector<2x128xf32>
    tpu.vector_store %arg7[%c0_6, %c0_7], %7 {strides = array<i32>} : memref<2x128xf32, #tpu.memory_space<vmem>>, vector<2x128xf32>,
    %c0_i32_8 = arith.constant 0 : i32
    %9 = arith.cmpi eq, %arg2, %c0_i32_8 : i32
    %10 = arith.extui %9 : i1 to i32
    %c0_i32_9 = arith.constant 0 : i32
    %11 = arith.cmpi ne, %10, %c0_i32_9 : i32
    scf.if %11 {
      %c0_10 = arith.constant 0 : index
      %c0_11 = arith.constant 0 : index
      %12 = vector.load %arg7[%c0_10, %c0_11] : memref<2x128xf32, #tpu.memory_space<vmem>>, vector<2x128xf32>
      %c0_12 = arith.constant 0 : index
      %c0_13 = arith.constant 0 : index
      %13 = vector.load %arg5[%c0_12, %c0_13] : memref<1x128xf32, #tpu.memory_space<vmem>>, vector<1x128xf32>
      %14 = vector.broadcast %13 : vector<1x128xf32> to vector<2x128xf32>
      %15 = arith.addf %12, %14 : vector<2x128xf32>
      %16 = tpu.iota {dimensions = array<i32: 1>} : vector<2x128xi32>
      %c10_i32 = arith.constant 10 : i32
      %17 = vector.broadcast %c10_i32 : i32 to vector<2x128xi32>
      %18 = arith.cmpi slt, %16, %17 : vector<2x128xi32>
      %cst_14 = arith.constant 0xFF800000 : f32
      %19 = vector.broadcast %cst_14 : f32 to vector<2x128xf32>
      %20 = arith.select %18, %15, %19 : vector<2x128xi1>, vector<2x128xf32>
      %cst_15 = arith.constant dense<0xFF800000> : vector<2xf32>
      %21 = vector.multi_reduction <maximumf>, %20, %cst_15 [1] : vector<2x128xf32> to vector<2xf32>
      %22 = vector.shape_cast %21 : vector<2xf32> to vector<2x1xf32>
      %23 = vector.broadcast %22 : vector<2x1xf32> to vector<2x128xf32>
      %24 = arith.subf %15, %23 : vector<2x128xf32>
      %25 = math.exp %24 : vector<2x128xf32>
      %cst_16 = arith.constant 0.000000e+00 : f32
      %26 = vector.broadcast %cst_16 : f32 to vector<2x128xf32>
      %27 = arith.select %18, %25, %26 : vector<2x128xi1>, vector<2x128xf32>
      %cst_17 = arith.constant dense<0.000000e+00> : vector<2xf32>
      %28 = vector.multi_reduction <add>, %27, %cst_17 [1] : vector<2x128xf32> to vector<2xf32>
      %29 = vector.shape_cast %28 : vector<2xf32> to vector<2x1xf32>
      %30 = math.log %29 : vector<2x1xf32>
      %31 = vector.broadcast %30 : vector<2x1xf32> to vector<2x128xf32>
      %32 = arith.subf %24, %31 : vector<2x128xf32>
      %c0_18 = arith.constant 0 : index
      %c0_19 = arith.constant 0 : index
      %33 = vector.load %arg6[%c0_18, %c0_19] : memref<2x128xf32, #tpu.memory_space<vmem>>, vector<2x128xf32>
      tpu.vector_store %arg6[%c0_18, %c0_19], %32 {strides = array<i32>} : memref<2x128xf32, #tpu.memory_space<vmem>>, vector<2x128xf32>,
    } else {
    }
    return
  }
  func.func @transform_0(%arg0: i32, %arg1: i32, %arg2: i32) -> (i32, i32) {
    %c0_i32 = arith.constant 0 : i32
    return %arg0, %arg2 : i32, i32
  }
  func.func @transform_1(%arg0: i32, %arg1: i32, %arg2: i32) -> (i32, i32) {
    %c0_i32 = arith.constant 0 : i32
    return %arg2, %arg1 : i32, i32
  }
  func.func @transform_2(%arg0: i32, %arg1: i32, %arg2: i32) -> (i32, i32) {
    %c0_i32 = arith.constant 0 : i32
    %c0_i32_0 = arith.constant 0 : i32
    return %c0_i32, %arg1 : i32, i32
  }
  func.func @transform_3(%arg0: i32, %arg1: i32, %arg2: i32) -> (i32, i32) {
    %c0_i32 = arith.constant 0 : i32
    return %arg0, %arg1 : i32, i32
  }
}

</mosaic_0001>

<llo_original>
// kernel: mlp_forward.2
$region0: #{mlp_forward.2}
  #allocation0 [shape = 'u32[]', space=smem, size = 0x4, offset = 0x4, fixed_abs, tag = 'smem constant byte address 0x4 - core index']
  #allocation1 [shape = 'u32[144,128]{1,0:T(1,128)}', space=vmem, size = 0x12000, scoped, tag = 'internal scratch']
  #allocation2 [shape = 'f32[2,128]{1,0:T(2,128)}', space=vmem, size = 0x400, scoped, tag = 'scratch operand']
  %s0 = inlined_call_operand.vmem [shape: bf16[2,1024], index: 0, kind: input, shape index: {}]
  %s1 = inlined_call_operand.vmem [shape: bf16[1024,128], index: 1, kind: input, shape index: {}]
  %s2 = inlined_call_operand.vmem [shape: f32[1,128], index: 2, kind: input, shape index: {}]
  %s3 = inlined_call_operand.vmem [shape: bf16[2,128], index: 3, kind: output, shape index: {}]
  %s4 = sld [smem:[#allocation0]]
  $region53: #{mlp_forward.2} parent=0
    _
  %s6 = ssub.s32 1, %s4
  %s7 = scalar_select 0, %s6, %s4
  loop: start=0, step=1, limit=4
  $region2: #{mlp_forward.2} parent=0 // loop_pre_header
    _
  $region3: #{mlp_forward.2} parent=0 // loop_header
    %s9 = sphi 0, %s13
    %p10 = scmp.ge.s32.totalorder %s9, 4
    %s16 = sphi 0, %s35
    %s17 = sphi 0, %s31
    %s18 = sphi 0, %s27
    %s19 = sphi 0, %s16
    %s20 = sphi 0, %s17
    %s21 = sphi 0, %s18
    %s22 = sphi 0, %s19
    %s23 = sphi 0, %s20
    %s24 = sphi 0, %s21
    %s40 = sphi 0, %s42
    %s43 = sphi 0, %s40
    %s44 = sphi 0, %s43
    %s60 = sphi 0, %s44
    %s68 = sphi 0, %s70
    %s71 = sphi 0, %s68
    %s72 = sphi 0, %s71
    %s88 = sphi 0, %s72
    %s94 = sphi 0, %s96
    %s97 = sphi 0, %s94
    %s98 = sphi 0, %s97
    %s114 = sphi 0, %s98
    %s122 = sphi 0, %s124
    %s125 = sphi 0, %s122
    %s126 = sphi 0, %s125
    %s142 = sphi 0, %s126
  $region4: #{mlp_forward.2} parent=0 // loop_header_branch
    %12 = sbr.rel (%p10) target = $region8
  $region5: #{mlp_forward.2} parent=0 // loop_body
    %s14 = ssub.s32 %s9, 1
    %s15 = ssub.s32 %s9, 2
    %s25 = sadd.s32 1, %s18
    %p26 = scmp.ge.s32.totalorder %s25, 2
    %s27 = scalar_select %p26, 0, %s25
    %s28 = sadd.s32 1, %s17
    %s29 = scalar_select %p26, %s28, %s17
    %p30 = scmp.ge.s32.totalorder %s29, 1
    %s31 = scalar_select %p30, 0, %s29
    %s32 = sadd.s32 1, %s16
    %s33 = scalar_select %p30, %s32, %s16
    %p34 = scmp.ge.s32.totalorder %s33, 1
    %s35 = scalar_select %p34, 0, %s33
    %s36 = ssub.s32 %s16, %s35
    %s37 = ssub.s32 %s18, %s27
    %s38 = sor.u32 %s36, %s37
    %p39 = scmp.eq.s32.totalorder %s38, 0
    %s41 = sadd.s32 %s40, 1
    %s42 = scalar_select %p39, %s40, %s41
    %p45 = pneg %p39
    %p46 = scmp.eq.s32.totalorder %s9, 1
    %p47 = por %p45, %p46
    %p48 = scmp.ne.s32.totalorder %s40, %s43
    %p49 = scmp.eq.s32.totalorder %s9, 0
    %p50 = por %p48, %p49
    %p51 = scmp.ne.s32.totalorder %s40, %s43
    %p52 = scmp.eq.s32.totalorder %s14, 1
    %p53 = por %p51, %p52
    %p54 = scmp.ne.s32.totalorder %s43, %s44
    %p55 = scmp.eq.s32.totalorder %s14, 0
    %p56 = por %p54, %p55
    %p57 = scmp.ne.s32.totalorder %s43, %s44
    %p58 = scmp.eq.s32.totalorder %s15, 1
    %p59 = por %p57, %p58
    %p61 = scmp.ne.s32.totalorder %s44, %s60
    %p62 = scmp.eq.s32.totalorder %s15, 0
    %p63 = por %p61, %p62
    %s64 = ssub.s32 %s18, %s27
    %s65 = ssub.s32 %s17, %s31
    %s66 = sor.u32 %s64, %s65
    %p67 = scmp.eq.s32.totalorder %s66, 0
    %s69 = sadd.s32 %s68, 1
    %s70 = scalar_select %p67, %s68, %s69
    %p73 = pneg %p67
    %p74 = scmp.eq.s32.totalorder %s9, 1
    %p75 = por %p73, %p74
    %p76 = scmp.ne.s32.totalorder %s68, %s71
    %p77 = scmp.eq.s32.totalorder %s9, 0
    %p78 = por %p76, %p77
    %p79 = scmp.ne.s32.totalorder %s68, %s71
    %p80 = scmp.eq.s32.totalorder %s14, 1
    %p81 = por %p79, %p80
    %p82 = scmp.ne.s32.totalorder %s71, %s72
    %p83 = scmp.eq.s32.totalorder %s14, 0
    %p84 = por %p82, %p83
    %p85 = scmp.ne.s32.totalorder %s71, %s72
    %p86 = scmp.eq.s32.totalorder %s15, 1
    %p87 = por %p85, %p86
    %p89 = scmp.ne.s32.totalorder %s72, %s88
    %p90 = scmp.eq.s32.totalorder %s15, 0
    %p91 = por %p89, %p90
    %s92 = ssub.s32 %s17, %s31
    %p93 = scmp.eq.s32.totalorder %s92, 0
    %s95 = sadd.s32 %s94, 1
    %s96 = scalar_select %p93, %s94, %s95
    %p99 = pneg %p93
    %p100 = scmp.eq.s32.totalorder %s9, 1
    %p101 = por %p99, %p100
    %p102 = scmp.ne.s32.totalorder %s94, %s97
    %p103 = scmp.eq.s32.totalorder %s9, 0
    %p104 = por %p102, %p103
    %p105 = scmp.ne.s32.totalorder %s94, %s97
    %p106 = scmp.eq.s32.totalorder %s14, 1
    %p107 = por %p105, %p106
    %p108 = scmp.ne.s32.totalorder %s97, %s98
    %p109 = scmp.eq.s32.totalorder %s14, 0
    %p110 = por %p108, %p109
    %p111 = scmp.ne.s32.totalorder %s97, %s98
    %p112 = scmp.eq.s32.totalorder %s15, 1
    %p113 = por %p111, %p112
    %p115 = scmp.ne.s32.totalorder %s98, %s114
    %p116 = scmp.eq.s32.totalorder %s15, 0
    %p117 = por %p115, %p116
    %s118 = ssub.s32 %s16, %s35
    %s119 = ssub.s32 %s17, %s31
    %s120 = sor.u32 %s118, %s119
    %p121 = scmp.eq.s32.totalorder %s120, 0
    %s123 = sadd.s32 %s122, 1
    %s124 = scalar_select %p121, %s122, %s123
    %p127 = pneg %p121
    %p128 = scmp.eq.s32.totalorder %s9, 1
    %p129 = por %p127, %p128
    %p130 = scmp.ne.s32.totalorder %s122, %s125
    %p131 = scmp.eq.s32.totalorder %s9, 0
    %p132 = por %p130, %p131
    %p133 = scmp.ne.s32.totalorder %s122, %s125
    %p134 = scmp.eq.s32.totalorder %s14, 1
    %p135 = por %p133, %p134
    %p136 = scmp.ne.s32.totalorder %s125, %s126
    %p137 = scmp.eq.s32.totalorder %s14, 0
    %p138 = por %p136, %p137
    %p139 = scmp.ne.s32.totalorder %s125, %s126
    %p140 = scmp.eq.s32.totalorder %s15, 1
    %p141 = por %p139, %p140
    %p143 = scmp.ne.s32.totalorder %s126, %s142
    %p144 = scmp.eq.s32.totalorder %s15, 0
    %p145 = por %p143, %p144
    %p146 = scmp.le.s32.totalorder 1, %s9
    %p147 = scmp.lt.s32.totalorder %s9, 3
    %p148 = pnand %p146, %p147
    %p149 = pneg %p148
    // Predicated region
    $region9: #{mlp_forward.2} parent=5 // pred_check
      _
    $region10: #{mlp_forward.2} parent=5 // pred_check_branch
      %151 = sbr.rel (%p148) target = $region12
    $region11: #{mlp_forward.2} parent=5 // pred_region
      %s152 = ssub.s32 %s9, 1
      // Predicated region
      $region13: #{mlp_forward.2} parent=11 // pred_check
        %p153 = pneg %p110
      $region14: #{mlp_forward.2} parent=11 // pred_check_branch
        %155 = sbr.rel (%p153) target = $region16
      $region15: #{mlp_forward.2} parent=11 // pred_region
        %p156 = scmp.lt.s32.totalorder %s20, 0
        %s157 = scalar_select %p156, %s20, 0
        %s158 = scalar_lea.vmem %s2, %s157
      $region16: #{mlp_forward.2} parent=11 // pred_fallthru
        _
    $region12: #{mlp_forward.2} parent=5 // pred_fallthru
      _
    %p159 = scmp.lt.s32.totalorder %s9, 2
    // Predicated region
    $region17: #{mlp_forward.2} parent=5 // pred_check
      %p160 = pneg %p159
    $region18: #{mlp_forward.2} parent=5 // pred_check_branch
      %162 = sbr.rel (%p160) target = $region20
    $region19: #{mlp_forward.2} parent=5 // pred_region
      // Predicated region
      $region21: #{mlp_forward.2} parent=19 // pred_check
        %p163 = pneg %p50
      $region22: #{mlp_forward.2} parent=19 // pred_check_branch
        %165 = sbr.rel (%p163) target = $region24
      $region23: #{mlp_forward.2} parent=19 // pred_region
        %s166 = smul.u32 4, %s18
        %p167 = scmp.lt.s32.totalorder %s16, 0
        %s168 = scalar_select %p167, %s16, 0
        %p169 = scmp.lt.s32.totalorder %s166, 7
        %s170 = scalar_select %p169, %s166, 7
        %s171 = smul.addr %s168, 8
        %s172 = sadd.s32 %s170, %s171
        %s173 = scalar_lea.vmem %s0, %s172
        %s174 = smul.u32 4, %s18
      $region24: #{mlp_forward.2} parent=19 // pred_fallthru
        _
      // Predicated region
      $region25: #{mlp_forward.2} parent=19 // pred_check
        %p175 = pneg %p78
      $region26: #{mlp_forward.2} parent=19 // pred_check_branch
        %177 = sbr.rel (%p175) target = $region28
      $region27: #{mlp_forward.2} parent=19 // pred_region
        %s178 = smul.u32 64, %s18
        %p179 = scmp.lt.s32.totalorder %s178, 127
        %s180 = scalar_select %p179, %s178, 127
        %p181 = scmp.lt.s32.totalorder %s17, 0
        %s182 = scalar_select %p181, %s17, 0
        %s183 = sadd.s32 %s182, %s180
        %s184 = smul.addr %s183, 4
        %s185 = scalar_lea.vmem %s1, %s184
        %s186 = smul.u32 64, %s18
      $region28: #{mlp_forward.2} parent=19 // pred_fallthru
        _
    $region20: #{mlp_forward.2} parent=5 // pred_fallthru
      _
    %p187 = scmp.le.s32.totalorder 1, %s9
    %p188 = scmp.lt.s32.totalorder %s9, 3
    %p189 = pnand %p187, %p188
    %p190 = pneg %p189
    // Predicated region
    $region29: #{mlp_forward.2} parent=5 // pred_check
      _
    $region30: #{mlp_forward.2} parent=5 // pred_check_branch
      %192 = sbr.rel (%p189) target = $region32
    $region31: #{mlp_forward.2} parent=5 // pred_region
      %s193 = ssub.s32 %s9, 1
      %s194 = smul.u32 4, %s21
      %p195 = scmp.lt.s32.totalorder %s19, 0
      %s196 = scalar_select %p195, %s19, 0
      %p197 = scmp.lt.s32.totalorder %s194, 7
      %s198 = scalar_select %p197, %s194, 7
      %s199 = smul.addr %s196, 8
      %s200 = sadd.s32 %s198, %s199
      %s201 = scalar_lea.vmem %s0, %s200
      %p202 = pneg %p56
      %p203 = pneg %p53
      %s204 = smul.u32 64, %s21
      %p205 = scmp.lt.s32.totalorder %s204, 127
      %s206 = scalar_select %p205, %s204, 127
      %p207 = scmp.lt.s32.totalorder %s20, 0
      %s208 = scalar_select %p207, %s20, 0
      %s209 = sadd.s32 %s208, %s206
      %s210 = smul.addr %s209, 4
      %s211 = scalar_lea.vmem %s1, %s210
      %p212 = pneg %p84
      %p213 = pneg %p81
      %p214 = scmp.lt.s32.totalorder %s20, 0
      %s215 = scalar_select %p214, %s20, 0
      %s216 = scalar_lea.vmem %s2, %s215
      %p217 = pneg %p110
      %p218 = pneg %p107
      %p219 = pneg %p138
      %p220 = pneg %p135
      %p221 = scmp.lt.s32.totalorder %s19, 0
      %s222 = scalar_select %p221, %s19, 0
      %p223 = scmp.lt.s32.totalorder %s20, 0
      %s224 = scalar_select %p223, %s20, 0
      %s225 = sadd.s32 %s224, %s222
      %s226 = scalar_lea.vmem %s3, %s225
      %s227 = smul.u32 4, %s21
      %p228 = scmp.lt.s32.totalorder %s19, 0
      %s229 = scalar_select %p228, %s19, 0
      %p230 = scmp.lt.s32.totalorder %s227, 7
      %s231 = scalar_select %p230, %s227, 7
      %s232 = smul.addr %s229, 8
      %s233 = sadd.s32 %s231, %s232
      %s234 = scalar_lea.vmem %s0, %s233
      %s235 = smul.u32 4, %s21
      %s236 = smul.u32 64, %s21
      %p237 = scmp.lt.s32.totalorder %s236, 127
      %s238 = scalar_select %p237, %s236, 127
      %p239 = scmp.lt.s32.totalorder %s20, 0
      %s240 = scalar_select %p239, %s20, 0
      %s241 = sadd.s32 %s240, %s238
      %s242 = smul.addr %s241, 4
      %s243 = scalar_lea.vmem %s1, %s242
      %s244 = smul.u32 64, %s21
      %p245 = scmp.lt.s32.totalorder %s20, 0
      %s246 = scalar_select %p245, %s20, 0
      %s247 = scalar_lea.vmem %s2, %s246
      %p248 = scmp.lt.s32.totalorder %s19, 0
      %s249 = scalar_select %p248, %s19, 0
      %p250 = scmp.lt.s32.totalorder %s20, 0
      %s251 = scalar_select %p250, %s20, 0
      %s252 = sadd.s32 %s251, %s249
      %s253 = scalar_lea.vmem %s3, %s252
      %p255 = scmp.eq.s32.totalorder %s21, 0
      // Predicated region
      $region33: #{mlp_forward.2} parent=31 // pred_check
        %p256 = pneg %p255
      $region34: #{mlp_forward.2} parent=31 // pred_check_branch
        %258 = sbr.rel (%p256) target = $region36
      $region35: #{mlp_forward.2} parent=31 // pred_region
        %259 = vst [vmem:[#allocation2] sm:$0x3] 0.0
      $region36: #{mlp_forward.2} parent=31 // pred_fallthru
        _
      %v260 = vld [vmem:[#allocation2] sm:$0x3]
      %v261 = vld [vmem:[%s234] sm:$0xf]
      %v262 = vld [vmem:[%s243] sm:$0xf]
      %v263 = vld [vmem:[%s243 + $0x4] sm:$0xf]
      %v264 = vld [vmem:[%s243 + $0x8] sm:$0xf]
      %v265 = vld [vmem:[%s243 + $0xc] sm:$0xf]
      %v266 = vld [vmem:[%s243 + $0x10] sm:$0xf]
      %v267 = vld [vmem:[%s243 + $0x14] sm:$0xf]
      %v268 = vld [vmem:[%s243 + $0x18] sm:$0xf]
      %v269 = vld [vmem:[%s243 + $0x1c] sm:$0xf]
      %v270 = vld [vmem:[%s243 + $0x20] sm:$0xf]
      %v271 = vld [vmem:[%s243 + $0x24] sm:$0xf]
      %v272 = vld [vmem:[%s243 + $0x28] sm:$0xf]
      %v273 = vld [vmem:[%s243 + $0x2c] sm:$0xf]
      %v274 = vld [vmem:[%s243 + $0x30] sm:$0xf]
      %v275 = vld [vmem:[%s243 + $0x34] sm:$0xf]
      %v276 = vld [vmem:[%s243 + $0x38] sm:$0xf]
      %v277 = vld [vmem:[%s243 + $0x3c] sm:$0xf]
      %v278 = vld [vmem:[%s243 + $0x40] sm:$0xf]
      %v279 = vld [vmem:[%s243 + $0x44] sm:$0xf]
      %v280 = vld [vmem:[%s243 + $0x48] sm:$0xf]
      %v281 = vld [vmem:[%s243 + $0x4c] sm:$0xf]
      %v282 = vld [vmem:[%s243 + $0x50] sm:$0xf]
      %v283 = vld [vmem:[%s243 + $0x54] sm:$0xf]
      %v284 = vld [vmem:[%s243 + $0x58] sm:$0xf]
      %v285 = vld [vmem:[%s243 + $0x5c] sm:$0xf]
      %v286 = vld [vmem:[%s243 + $0x60] sm:$0xf]
      %v287 = vld [vmem:[%s243 + $0x64] sm:$0xf]
      %v288 = vld [vmem:[%s243 + $0x68] sm:$0xf]
      %v289 = vld [vmem:[%s243 + $0x6c] sm:$0xf]
      %v290 = vld [vmem:[%s243 + $0x70] sm:$0xf]
      %v291 = vld [vmem:[%s243 + $0x74] sm:$0xf]
      %v292 = vld [vmem:[%s243 + $0x78] sm:$0xf]
      %v293 = vld [vmem:[%s243 + $0x7c] sm:$0xf]
      %v294 = vld [vmem:[%s243 + $0x80] sm:$0xf]
      %v295 = vld [vmem:[%s243 + $0x84] sm:$0xf]
      %v296 = vld [vmem:[%s243 + $0x88] sm:$0xf]
      %v297 = vld [vmem:[%s243 + $0x8c] sm:$0xf]
      %v298 = vld [vmem:[%s243 + $0x90] sm:$0xf]
      %v299 = vld [vmem:[%s243 + $0x94] sm:$0xf]
      %v300 = vld [vmem:[%s243 + $0x98] sm:$0xf]
      %v301 = vld [vmem:[%s243 + $0x9c] sm:$0xf]
      %v302 = vld [vmem:[%s243 + $0xa0] sm:$0xf]
      %v303 = vld [vmem:[%s243 + $0xa4] sm:$0xf]
      %v304 = vld [vmem:[%s243 + $0xa8] sm:$0xf]
      %v305 = vld [vmem:[%s243 + $0xac] sm:$0xf]
      %v306 = vld [vmem:[%s243 + $0xb0] sm:$0xf]
      %v307 = vld [vmem:[%s243 + $0xb4] sm:$0xf]
      %v308 = vld [vmem:[%s243 + $0xb8] sm:$0xf]
      %v309 = vld [vmem:[%s243 + $0xbc] sm:$0xf]
      %v310 = vld [vmem:[%s243 + $0xc0] sm:$0xf]
      %v311 = vld [vmem:[%s243 + $0xc4] sm:$0xf]
      %v312 = vld [vmem:[%s243 + $0xc8] sm:$0xf]
      %v313 = vld [vmem:[%s243 + $0xcc] sm:$0xf]
      %v314 = vld [vmem:[%s243 + $0xd0] sm:$0xf]
      %v315 = vld [vmem:[%s243 + $0xd4] sm:$0xf]
      %v316 = vld [vmem:[%s243 + $0xd8] sm:$0xf]
      %v317 = vld [vmem:[%s243 + $0xdc] sm:$0xf]
      %v318 = vld [vmem:[%s243 + $0xe0] sm:$0xf]
      %v319 = vld [vmem:[%s243 + $0xe4] sm:$0xf]
      %v320 = vld [vmem:[%s243 + $0xe8] sm:$0xf]
      %v321 = vld [vmem:[%s243 + $0xec] sm:$0xf]
      %v322 = vld [vmem:[%s243 + $0xf0] sm:$0xf]
      %v323 = vld [vmem:[%s243 + $0xf4] sm:$0xf]
      %v324 = vld [vmem:[%s243 + $0xf8] sm:$0xf]
      %v325 = vld [vmem:[%s243 + $0xfc] sm:$0xf]
      %v328 = vunpack.c.l.s4 1966171168
      %v329 = vunpack.c.0.s8 %v328
      %v330 = vlaneseq
      %v331 = vshrl.u32 %v330, 7
      %v332 = vsub.s32 %v329, %v331
      %v333 = vrot.slane %v261, %v332
      %v334 = vcombine.high %v333, %v333
      %v336 = vunpack.c.l.s4 1966171168
      %v337 = vunpack.c.0.s8 %v336
      %v338 = vlaneseq
      %v339 = vshrl.u32 %v338, 7
      %v340 = vsub.s32 %v337, %v339
      %v341 = vrot.slane %v333, %v340
      %v343 = vunpack.c.l.s4 1966171168
      %v344 = vunpack.c.0.s8 %v343
      %v345 = vlaneseq
      %v346 = vshrl.u32 %v345, 7
      %v347 = vsub.s32 %v344, %v346
      %v348 = vrot.slane %v334, %v347
      %v349 = vcombine.high %v341, %v341
      %v350 = vcombine.high %v348, %v348
      %v419 = vunpack.c.l.b16 %v262
      %v420 = vunpack.c.l.b16 %v263
      %v421 = vunpack.c.l.b16 %v264
      %v422 = vunpack.c.l.b16 %v265
      %v423 = vunpack.c.l.b16 %v266
      %v424 = vunpack.c.l.b16 %v267
      %v425 = vunpack.c.l.b16 %v268
      %v426 = vunpack.c.l.b16 %v269
      %v427 = vunpack.c.l.b16 %v270
      %v428 = vunpack.c.l.b16 %v271
      %v429 = vunpack.c.l.b16 %v272
      %v430 = vunpack.c.l.b16 %v273
      %v431 = vunpack.c.l.b16 %v274
      %v432 = vunpack.c.l.b16 %v275
      %v433 = vunpack.c.l.b16 %v276
      %v434 = vunpack.c.l.b16 %v277
      %v435 = vunpack.c.l.b16 %v278
      %v436 = vunpack.c.l.b16 %v279
      %v437 = vunpack.c.l.b16 %v280
      %v438 = vunpack.c.l.b16 %v281
      %v439 = vunpack.c.l.b16 %v282
      %v440 = vunpack.c.l.b16 %v283
      %v441 = vunpack.c.l.b16 %v284
      %v442 = vunpack.c.l.b16 %v285
      %v443 = vunpack.c.l.b16 %v286
      %v444 = vunpack.c.l.b16 %v287
      %v445 = vunpack.c.l.b16 %v288
      %v446 = vunpack.c.l.b16 %v289
      %v447 = vunpack.c.l.b16 %v290
      %v448 = vunpack.c.l.b16 %v291
      %v449 = vunpack.c.l.b16 %v292
      %v450 = vunpack.c.l.b16 %v293
      %v451 = vunpack.c.l.b16 %v294
      %v452 = vunpack.c.l.b16 %v295
      %v453 = vunpack.c.l.b16 %v296
      %v454 = vunpack.c.l.b16 %v297
      %v455 = vunpack.c.l.b16 %v298
      %v456 = vunpack.c.l.b16 %v299
      %v457 = vunpack.c.l.b16 %v300
      %v458 = vunpack.c.l.b16 %v301
      %v459 = vunpack.c.l.b16 %v302
      %v460 = vunpack.c.l.b16 %v303
      %v461 = vunpack.c.l.b16 %v304
      %v462 = vunpack.c.l.b16 %v305
      %v463 = vunpack.c.l.b16 %v306
      %v464 = vunpack.c.l.b16 %v307
      %v465 = vunpack.c.l.b16 %v308
      %v466 = vunpack.c.l.b16 %v309
      %v467 = vunpack.c.l.b16 %v310
      %v468 = vunpack.c.l.b16 %v311
      %v469 = vunpack.c.l.b16 %v312
      %v470 = vunpack.c.l.b16 %v313
      %v471 = vunpack.c.l.b16 %v314
      %v472 = vunpack.c.l.b16 %v315
      %v473 = vunpack.c.l.b16 %v316
      %v474 = vunpack.c.l.b16 %v317
      %v475 = vunpack.c.l.b16 %v318
      %v476 = vunpack.c.l.b16 %v319
      %v477 = vunpack.c.l.b16 %v320
      %v478 = vunpack.c.l.b16 %v321
      %v479 = vunpack.c.l.b16 %v322
      %v480 = vunpack.c.l.b16 %v323
      %v481 = vunpack.c.l.b16 %v324
      %v482 = vunpack.c.l.b16 %v325
      %v483 = vpack.c.b16 %v420, %v419
      %v484 = vpack.c.b16 %v422, %v421
      %v485 = vpack.c.b16 %v424, %v423
      %v486 = vpack.c.b16 %v426, %v425
      %v487 = vpack.c.b16 %v428, %v427
      %v488 = vpack.c.b16 %v430, %v429
      %v489 = vpack.c.b16 %v432, %v431
      %v490 = vpack.c.b16 %v434, %v433
      %v491 = vpack.c.b16 %v436, %v435
      %v492 = vpack.c.b16 %v438, %v437
      %v493 = vpack.c.b16 %v440, %v439
      %v494 = vpack.c.b16 %v442, %v441
      %v495 = vpack.c.b16 %v444, %v443
      %v496 = vpack.c.b16 %v446, %v445
      %v497 = vpack.c.b16 %v448, %v447
      %v498 = vpack.c.b16 %v450, %v449
      %v499 = vpack.c.b16 %v452, %v451
      %v500 = vpack.c.b16 %v454, %v453
      %v501 = vpack.c.b16 %v456, %v455
      %v502 = vpack.c.b16 %v458, %v457
      %v503 = vpack.c.b16 %v460, %v459
      %v504 = vpack.c.b16 %v462, %v461
      %v505 = vpack.c.b16 %v464, %v463
      %v506 = vpack.c.b16 %v466, %v465
      %v507 = vpack.c.b16 %v468, %v467
      %v508 = vpack.c.b16 %v470, %v469
      %v509 = vpack.c.b16 %v472, %v471
      %v510 = vpack.c.b16 %v474, %v473
      %v511 = vpack.c.b16 %v476, %v475
      %v512 = vpack.c.b16 %v478, %v477
      %v513 = vpack.c.b16 %v480, %v479
      %v514 = vpack.c.b16 %v482, %v481
      %547 = vmatprep.subr.bf16.mxu0 0
      %548 = vmatpush1.bf16.msra.mxu0 %v483
      %549 = vmatprep.subr.bf16.mxu0 0
      %550 = vmatpush1.bf16.msra.mxu0 %v484
      %551 = vmatprep.subr.bf16.mxu0 0
      %552 = vmatpush1.bf16.msra.mxu0 %v485
      %553 = vmatprep.subr.bf16.mxu0 0
      %554 = vmatpush1.bf16.msra.mxu0 %v486
      %555 = vmatprep.subr.bf16.mxu0 0
      %556 = vmatpush1.bf16.msra.mxu0 %v487
      %557 = vmatprep.subr.bf16.mxu0 0
      %558 = vmatpush1.bf16.msra.mxu0 %v488
      %559 = vmatprep.subr.bf16.mxu0 0
      %560 = vmatpush1.bf16.msra.mxu0 %v489
      %561 = vmatprep.subr.bf16.mxu0 0
      %562 = vmatpush1.bf16.msra.mxu0 %v490
      %563 = vmatprep.subr.bf16.mxu0 0
      %564 = vmatpush1.bf16.msra.mxu0 %v491
      %565 = vmatprep.subr.bf16.mxu0 0
      %566 = vmatpush1.bf16.msra.mxu0 %v492
      %567 = vmatprep.subr.bf16.mxu0 0
      %568 = vmatpush1.bf16.msra.mxu0 %v493
      %569 = vmatprep.subr.bf16.mxu0 0
      %570 = vmatpush1.bf16.msra.mxu0 %v494
      %571 = vmatprep.subr.bf16.mxu0 0
      %572 = vmatpush1.bf16.msra.mxu0 %v495
      %573 = vmatprep.subr.bf16.mxu0 0
      %574 = vmatpush1.bf16.msra.mxu0 %v496
      %575 = vmatprep.subr.bf16.mxu0 0
      %576 = vmatpush1.bf16.msra.mxu0 %v497
      %577 = vmatprep.subr.bf16.mxu0 0
      %578 = vmatpush1.bf16.msra.mxu0 %v498
      %579 = vmatprep.mubr.bf16.mxu0 %v348
      %580 = vmatmul.mubr.bf16.gmra.mrb[0].mxu0 %v341
      %v581 = vpop.f32.mrb[0].mxu0
      %v582 = vadd.f32 0.0, %v581
      %v583 = vpop.f32.mrb[0].mxu0
      %v584 = vpop.f32.mrb[0].mxu0
      %v585 = vpop.f32.mrb[0].mxu0
      %586 = vdwg.mxu0
      %587 = vmatprep.subr.bf16.mxu0 0
      %588 = vmatpush1.bf16.msra.mxu0 %v499
      %589 = vmatprep.subr.bf16.mxu0 0
      %590 = vmatpush1.bf16.msra.mxu0 %v500
      %591 = vmatprep.subr.bf16.mxu0 0
      %592 = vmatpush1.bf16.msra.mxu0 %v501
      %593 = vmatprep.subr.bf16.mxu0 0
      %594 = vmatpush1.bf16.msra.mxu0 %v502
      %595 = vmatprep.subr.bf16.mxu0 0
      %596 = vmatpush1.bf16.msra.mxu0 %v503
      %597 = vmatprep.subr.bf16.mxu0 0
      %598 = vmatpush1.bf16.msra.mxu0 %v504
      %599 = vmatprep.subr.bf16.mxu0 0
      %600 = vmatpush1.bf16.msra.mxu0 %v505
      %601 = vmatprep.subr.bf16.mxu0 0
      %602 = vmatpush1.bf16.msra.mxu0 %v506
      %603 = vmatprep.subr.bf16.mxu0 0
      %604 = vmatpush1.bf16.msra.mxu0 %v507
      %605 = vmatprep.subr.bf16.mxu0 0
      %606 = vmatpush1.bf16.msra.mxu0 %v508
      %607 = vmatprep.subr.bf16.mxu0 0
      %608 = vmatpush1.bf16.msra.mxu0 %v509
      %609 = vmatprep.subr.bf16.mxu0 0
      %610 = vmatpush1.bf16.msra.mxu0 %v510
      %611 = vmatprep.subr.bf16.mxu0 0
      %612 = vmatpush1.bf16.msra.mxu0 %v511
      %613 = vmatprep.subr.bf16.mxu0 0
      %614 = vmatpush1.bf16.msra.mxu0 %v512
      %615 = vmatprep.subr.bf16.mxu0 0
      %616 = vmatpush1.bf16.msra.mxu0 %v513
      %617 = vmatprep.subr.bf16.mxu0 0
      %618 = vmatpush1.bf16.msra.mxu0 %v514
      %619 = vmatprep.mubr.bf16.mxu0 %v350
      %620 = vmatmul.mubr.bf16.gmra.mrb[0].mxu0 %v349
      %v621 = vpop.f32.mrb[0].mxu0
      %v622 = vadd.f32 %v582, %v621
      %v623 = vpop.f32.mrb[0].mxu0
      %v624 = vpop.f32.mrb[0].mxu0
      %v625 = vpop.f32.mrb[0].mxu0
      %626 = vdwg.mxu0
      %v627 = vadd.f32 %v260, %v622
      %628 = vst [vmem:[#allocation2] sm:$0x3] %v627
      %p629 = scmp.eq.s32.totalorder %s21, 1
      // Predicated region
      $region37: #{mlp_forward.2} parent=31 // pred_check
        %p630 = pneg %p629
      $region38: #{mlp_forward.2} parent=31 // pred_check_branch
        %632 = sbr.rel (%p630) target = $region40
      $region39: #{mlp_forward.2} parent=31 // pred_region
        %v633 = vld [vmem:[#allocation2] sm:$0x3]
        %v634 = vld [vmem:[%s247] sm:$0x1]
        %v636 = vlaneseq
        %v637 = vshrl.u32 %v636, 7
        %v638 = vsub.s32 0, %v637
        %v639 = vrot.slane %v634, %v638
        %v641 = vadd.f32 %v633, %v639
        %v642 = vmax.f32 %v641, 0.0
        %v643 = vpack.c.bf16 %v642, %v642
        %644 = vst [vmem:[%s253] sm:$0x1] %v643
      $region40: #{mlp_forward.2} parent=31 // pred_fallthru
        _
      %p645 = scmp.lt.s32.totalorder %s19, 0
      %s646 = scalar_select %p645, %s19, 0
      %p647 = scmp.lt.s32.totalorder %s20, 0
      %s648 = scalar_select %p647, %s20, 0
      %s649 = sadd.s32 %s648, %s646
      %s650 = scalar_lea.vmem %s3, %s649
      // Predicated region
      $region41: #{mlp_forward.2} parent=31 // pred_check
        %p651 = pneg %p135
      $region42: #{mlp_forward.2} parent=31 // pred_check_branch
        %653 = sbr.rel (%p651) target = $region44
      $region43: #{mlp_forward.2} parent=31 // pred_region
        _
      $region44: #{mlp_forward.2} parent=31 // pred_fallthru
        _
      // Predicated region
      $region45: #{mlp_forward.2} parent=31 // pred_check
        %p654 = pneg %p135
      $region46: #{mlp_forward.2} parent=31 // pred_check_branch
        %656 = sbr.rel (%p654) target = $region48
      $region47: #{mlp_forward.2} parent=31 // pred_region
        %p657 = scmp.lt.s32.totalorder %s19, 0
        %s658 = scalar_select %p657, %s19, 0
        %p659 = scmp.lt.s32.totalorder %s20, 0
        %s660 = scalar_select %p659, %s20, 0
        %s661 = sadd.s32 %s660, %s658
        %s662 = scalar_lea.vmem %s3, %s661
      $region48: #{mlp_forward.2} parent=31 // pred_fallthru
        _
    $region32: #{mlp_forward.2} parent=5 // pred_fallthru
      _
    %p663 = scmp.le.s32.totalorder 2, %s9
    // Predicated region
    $region49: #{mlp_forward.2} parent=5 // pred_check
      %p664 = pneg %p663
    $region50: #{mlp_forward.2} parent=5 // pred_check_branch
      %666 = sbr.rel (%p664) target = $region52
    $region51: #{mlp_forward.2} parent=5 // pred_region
      %s667 = ssub.s32 %s9, 2
    $region52: #{mlp_forward.2} parent=5 // pred_fallthru
      _
  $region6: #{mlp_forward.2} parent=0 // loop_footer
    %s13 = sadd.s32 1, %s9
  $region7: #{mlp_forward.2} parent=0 // loop_footer_branch
    %8 = sbr.rel target = $region3
  $region8: #{mlp_forward.2} parent=0 // loop_exit
    _

// kernel: mlp_forward.3
$region0: #{mlp_forward.3}
  #allocation0 [shape = 'u32[]', space=smem, size = 0x4, offset = 0x4, fixed_abs, tag = 'smem constant byte address 0x4 - core index']
  #allocation1 [shape = 'u32[144,128]{1,0:T(1,128)}', space=vmem, size = 0x12000, scoped, tag = 'internal scratch']
  #allocation2 [shape = 'f32[2,128]{1,0:T(2,128)}', space=vmem, size = 0x400, scoped, tag = 'scratch operand']
  %s0 = inlined_call_operand.vmem [shape: bf16[2,128], index: 0, kind: input, shape index: {}]
  %s1 = inlined_call_operand.vmem [shape: bf16[128,128], index: 1, kind: input, shape index: {}]
  %s2 = inlined_call_operand.vmem [shape: f32[1,128], index: 2, kind: input, shape index: {}]
  %s3 = inlined_call_operand.hbm [shape: f32[2,128], index: 3, kind: output, shape index: {}]
  %s4 = sld [smem:[#allocation0]]
  $region30: #{mlp_forward.3} parent=0
    _
  %s6 = ssub.s32 1, %s4
  %s7 = scalar_select 0, %s6, %s4
  $region1: #{mlp_forward.3} parent=0
    #allocation3 [shape = 'u8[1024]{0}', space=vmem, size = 0x400, scoped, tag = 'output window, operand 0, single buffered']
    #allocation4 [shape = 's32[1]{0}', space=sflag, size = 0x4, scoped, tag = 'scoped memory for mlp_forward.3']
    %8 = vsyncpa [#allocation4], 0
    // Predicated region
    $region2: #{mlp_forward.3} parent=1 // pred_check
      _
    $region3: #{mlp_forward.3} parent=1 // pred_check_branch
      %10 = sbr.rel (0) target = $region5
    $region4: #{mlp_forward.3} parent=1 // pred_region
      _
    $region5: #{mlp_forward.3} parent=1 // pred_fallthru
      _
    // Predicated region
    $region6: #{mlp_forward.3} parent=1 // pred_check
      _
    $region7: #{mlp_forward.3} parent=1 // pred_check_branch
      %12 = sbr.rel (0) target = $region9
    $region8: #{mlp_forward.3} parent=1 // pred_region
      _
    $region9: #{mlp_forward.3} parent=1 // pred_fallthru
      _
    // Predicated region
    $region10: #{mlp_forward.3} parent=1 // pred_check
      _
    $region11: #{mlp_forward.3} parent=1 // pred_check_branch
      %14 = sbr.rel (0) target = $region13
    $region12: #{mlp_forward.3} parent=1 // pred_region
      _
    $region13: #{mlp_forward.3} parent=1 // pred_fallthru
      _
    %p16 = scmp.eq.s32.totalorder 0, 0
    // Predicated region
    $region14: #{mlp_forward.3} parent=1 // pred_check
      %p17 = pneg %p16
    $region15: #{mlp_forward.3} parent=1 // pred_check_branch
      %19 = sbr.rel (%p17) target = $region17
    $region16: #{mlp_forward.3} parent=1 // pred_region
      %20 = vst [vmem:[#allocation2] sm:$0x3] 0.0
    $region17: #{mlp_forward.3} parent=1 // pred_fallthru
      _
    %v21 = vld [vmem:[#allocation2] sm:$0x3]
    %v22 = vld [vmem:[%s0] sm:$0x1]
    %v23 = vld [vmem:[%s1] sm:$0xf]
    %v24 = vld [vmem:[%s1 + $0x4] sm:$0xf]
    %v25 = vld [vmem:[%s1 + $0x8] sm:$0xf]
    %v26 = vld [vmem:[%s1 + $0xc] sm:$0xf]
    %v27 = vld [vmem:[%s1 + $0x10] sm:$0xf]
    %v28 = vld [vmem:[%s1 + $0x14] sm:$0xf]
    %v29 = vld [vmem:[%s1 + $0x18] sm:$0xf]
    %v30 = vld [vmem:[%s1 + $0x1c] sm:$0xf]
    %v31 = vld [vmem:[%s1 + $0x20] sm:$0xf]
    %v32 = vld [vmem:[%s1 + $0x24] sm:$0xf]
    %v33 = vld [vmem:[%s1 + $0x28] sm:$0xf]
    %v34 = vld [vmem:[%s1 + $0x2c] sm:$0xf]
    %v35 = vld [vmem:[%s1 + $0x30] sm:$0xf]
    %v36 = vld [vmem:[%s1 + $0x34] sm:$0xf]
    %v37 = vld [vmem:[%s1 + $0x38] sm:$0xf]
    %v38 = vld [vmem:[%s1 + $0x3c] sm:$0xf]
    %v55 = vunpack.c.l.b16 %v23
    %v56 = vunpack.c.l.b16 %v24
    %v57 = vunpack.c.l.b16 %v25
    %v58 = vunpack.c.l.b16 %v26
    %v59 = vunpack.c.l.b16 %v27
    %v60 = vunpack.c.l.b16 %v28
    %v61 = vunpack.c.l.b16 %v29
    %v62 = vunpack.c.l.b16 %v30
    %v63 = vunpack.c.l.b16 %v31
    %v64 = vunpack.c.l.b16 %v32
    %v65 = vunpack.c.l.b16 %v33
    %v66 = vunpack.c.l.b16 %v34
    %v67 = vunpack.c.l.b16 %v35
    %v68 = vunpack.c.l.b16 %v36
    %v69 = vunpack.c.l.b16 %v37
    %v70 = vunpack.c.l.b16 %v38
    %v71 = vpack.c.b16 %v56, %v55
    %v72 = vpack.c.b16 %v58, %v57
    %v73 = vpack.c.b16 %v60, %v59
    %v74 = vpack.c.b16 %v62, %v61
    %v75 = vpack.c.b16 %v64, %v63
    %v76 = vpack.c.b16 %v66, %v65
    %v77 = vpack.c.b16 %v68, %v67
    %v78 = vpack.c.b16 %v70, %v69
    %87 = vmatprep.subr.bf16.mxu0 0
    %88 = vmatpush1.bf16.msra.mxu0 %v71
    %89 = vmatprep.subr.bf16.mxu0 0
    %90 = vmatpush1.bf16.msra.mxu0 %v72
    %91 = vmatprep.subr.bf16.mxu0 0
    %92 = vmatpush1.bf16.msra.mxu0 %v73
    %93 = vmatprep.subr.bf16.mxu0 0
    %94 = vmatpush1.bf16.msra.mxu0 %v74
    %95 = vmatprep.subr.bf16.mxu0 0
    %96 = vmatpush1.bf16.msra.mxu0 %v75
    %97 = vmatprep.subr.bf16.mxu0 0
    %98 = vmatpush1.bf16.msra.mxu0 %v76
    %99 = vmatprep.subr.bf16.mxu0 0
    %100 = vmatpush1.bf16.msra.mxu0 %v77
    %101 = vmatprep.subr.bf16.mxu0 0
    %102 = vmatpush1.bf16.msra.mxu0 %v78
    %103 = vmatprep.subr.bf16.mxu0 0
    %104 = vmatpush1.bf16.msra.mxu0 0
    %105 = vmatprep.subr.bf16.mxu0 0
    %106 = vmatpush1.bf16.msra.mxu0 0
    %107 = vmatprep.subr.bf16.mxu0 0
    %108 = vmatpush1.bf16.msra.mxu0 0
    %109 = vmatprep.subr.bf16.mxu0 0
    %110 = vmatpush1.bf16.msra.mxu0 0
    %111 = vmatprep.subr.bf16.mxu0 0
    %112 = vmatpush1.bf16.msra.mxu0 0
    %113 = vmatprep.subr.bf16.mxu0 0
    %114 = vmatpush1.bf16.msra.mxu0 0
    %115 = vmatprep.subr.bf16.mxu0 0
    %116 = vmatpush1.bf16.msra.mxu0 0
    %117 = vmatprep.subr.bf16.mxu0 0
    %118 = vmatpush1.bf16.msra.mxu0 0
    %119 = vmatprep.mubr.bf16.mxu0 0
    %120 = vmatmul.mubr.bf16.gmra.mrb[0].mxu0 %v22
    %v121 = vpop.f32.mrb[0].mxu0
    %v122 = vadd.f32 0.0, %v121
    %v123 = vpop.f32.mrb[0].mxu0
    %v124 = vpop.f32.mrb[0].mxu0
    %v125 = vpop.f32.mrb[0].mxu0
    %126 = vdwg.mxu0
    %v127 = vadd.f32 %v21, %v122
    %128 = vst [vmem:[#allocation2] sm:$0x3] %v127
    // Predicated region
    $region18: #{mlp_forward.3} parent=1 // pred_check
      %p129 = pneg %p16
    $region19: #{mlp_forward.3} parent=1 // pred_check_branch
      %131 = sbr.rel (%p129) target = $region21
    $region20: #{mlp_forward.3} parent=1 // pred_region
      %v132 = vld [vmem:[#allocation2] sm:$0x3]
      %v133 = vld [vmem:[%s2] sm:$0x1]
      %v135 = vlaneseq
      %v136 = vshrl.u32 %v135, 7
      %v137 = vsub.s32 0, %v136
      %v138 = vrot.slane %v133, %v137
      %v140 = vadd.f32 %v132, %v138
      %v141 = vlaneseq
      %v142 = vand.u32 %v141, 127
      %vm143 = vcmp.lt.s32.totalorder %v142, 10
      %v144 = vsel %vm143, %v140, -inf
      %vm145 = vcmask 1041408
      %v146 = vsel %vm145, %v144, -inf
      %147 = vmax.xlane.f32.xlu0 %v146
      %v148 = vpop.xlane.xlu0 %147
      %v149 = vsub.f32 %v140, %v148
      %v150 = vmul.f32 %v149, 1.442695
      %v151 = vpow.pop %v150
      %v152 = vsel %vm143, %v151, 0.0
      %v153 = vsel %vm145, %v152, 0.0
      %154 = vadd.xlane.f32.xlu0 %v153
      %v155 = vpop.xlane.xlu0 %154
      %v156 = vlog2.pop %v155
      %v157 = vmul.f32 %v156, 0.6931472
      %v158 = vsub.f32 %v149, %v157
      %159 = vst [vmem:[#allocation3] sm:$0x3] %v158
    $region21: #{mlp_forward.3} parent=1 // pred_fallthru
      _
    // Predicated region
    $region22: #{mlp_forward.3} parent=1 // pred_check
      _
    $region23: #{mlp_forward.3} parent=1 // pred_check_branch
      %161 = sbr.rel (0) target = $region25
    $region24: #{mlp_forward.3} parent=1 // pred_region
      %s163 = ssub.s32 32, 32
      %164 = vsyncadd [#allocation4], %s163
      %s166 = sshll.u32 [#allocation3], 4
      %s167 = int_to_ptr.vmem [resolvable:$true] %s166
      %169 = dma.vmem_to_hbm [thread:$0]  %s167, 32, %s3, [#allocation4]
    $region25: #{mlp_forward.3} parent=1 // pred_fallthru
      _
    // Predicated region
    $region26: #{mlp_forward.3} parent=1 // pred_check
      _
    $region27: #{mlp_forward.3} parent=1 // pred_check_branch
      %171 = sbr.rel (0) target = $region29
    $region28: #{mlp_forward.3} parent=1 // pred_region
      %172 = dma.done [#allocation4], 32
    $region29: #{mlp_forward.3} parent=1 // pred_fallthru
      _
    %173 = vsyncpa [#allocation4], 1

</llo_original>
